<compile_context>
chip_gen: v5e
topology: v5e:2x2
jax: 0.10.0
libtpu: 0.0.40
codegen_flags: <defaults>
</compile_context>

<pallas_src>
import functools

import jax
import jax.numpy as jnp
from jax.experimental import pallas as pl
from jax.experimental.pallas import tpu as pltpu


def _focal_ce_kernel(preds_ref, logit_t_ref, w_t_ref, out_ref, *, gamma):
    j = pl.program_id(1)

    @pl.when(j == 0)
    def _():
        out_ref[...] = jnp.zeros_like(out_ref)

    logits = preds_ref[...].astype(jnp.float32)          # (tm, C)
    logit_t = logit_t_ref[...]                           # (tm, 1) f32 (pre-gathered)
    w_t = w_t_ref[...]                                   # (tm, 1) f32 (pre-gathered)

    # numerically-stable log-sum-exp; only the target row entry of log-softmax
    # is needed, so the full (tm, C) log-softmax is never materialized.
    m = jnp.max(logits, axis=-1, keepdims=True)          # (tm, 1)
    lse = jnp.log(jnp.sum(jnp.exp(logits - m), axis=-1, keepdims=True))  # (tm, 1)
    logp_t = (logit_t - m) - lse                          # (tm, 1)
    p_t = jnp.exp(logp_t)                                 # (tm, 1)
    one_minus = jnp.maximum(1.0 - p_t, 0.0)               # clamp: avoid NaN in pow

    g = float(gamma)
    if g == 0.0:
        focal = jnp.ones_like(one_minus)
    elif g.is_integer() and 1 <= int(g) <= 16:
        # exponentiation by squaring -- avoids exp/log on the EUP for common
        # integer gammas (e.g. gamma=2).
        gi = int(g)
        base = one_minus
        focal = None
        while gi:
            if gi & 1:
                focal = base if focal is None else focal * base
            gi >>= 1
            if gi:
                base = base * base
    else:
        focal = jnp.power(one_minus, jnp.float32(g))

    ce = -w_t * logp_t                                     # (tm, 1)
    # broadcast the scalar partial sum over the lane-dense (1, 8, 128) block
    out_ref[...] = out_ref[...] + jnp.sum(focal * ce)


def _round_up(x, m):
    return ((x + m - 1) // m) * m


def focal_ce_loss(preds, targs, class_weight=None, gamma=2.0, *,
                  tm=None, num_chunks=2):
    """preds: (..., C) float, targs: (...,) int, class_weight: (C,) float or None."""
    C = preds.shape[-1]
    preds2d = preds.reshape(-1, C)
    targs1d = targs.reshape(-1).astype(jnp.int32)
    N = preds2d.shape[0]

    if class_weight is None:
        w = jnp.ones((C,), jnp.float32)
    else:
        w = class_weight.astype(jnp.float32)

    # Hoist the per-row gathers out of the kernel (cheap XLA gathers on (N,)).
    logit_t = jnp.take_along_axis(preds2d, targs1d[:, None], axis=-1).astype(jnp.float32)
    w_t = w[targs1d][:, None]

    itemsize = jnp.dtype(preds2d.dtype).itemsize
    sub = {4: 8, 2: 16, 1: 32}.get(itemsize, 8)           # sublane packing multiple

    num_chunks = max(1, int(num_chunks))
    rows_per_chunk = -(-N // num_chunks)

    if tm is None:
        target_block_bytes = 4 << 20                      # ~4 MiB preds block
        tm = max(sub, min(target_block_bytes // max(C * itemsize, 1), 2048))
    tm = max(sub, (int(tm) // sub) * sub)
    tm = min(tm, _round_up(rows_per_chunk, sub))

    steps_per_chunk = -(-rows_per_chunk // tm)
    n_pad = num_chunks * steps_per_chunk * tm

    if n_pad != N:
        pad = n_pad - N
        preds2d = jnp.pad(preds2d, ((0, pad), (0, 0)))
        logit_t = jnp.pad(logit_t, ((0, pad), (0, 0)))
        w_t = jnp.pad(w_t, ((0, pad), (0, 0)))            # zero weight => zero loss

    row_map = lambda c, j: (c * steps_per_chunk + j, 0)

    # Explicit scoped-VMEM budget: double-buffered preds block + f32 temporaries.
    block_bytes = tm * C * itemsize
    vmem_est = 2 * block_bytes + 3 * tm * C * 4 + 32 * tm * 4 + (2 << 20)
    vmem_limit = int(min(max(vmem_est, 32 << 20), 48 << 20))

    kernel = functools.partial(_focal_ce_kernel, gamma=float(gamma))

    partials = pl.pallas_call(
        kernel,
        out_shape=jax.ShapeDtypeStruct((num_chunks, 8, 128), jnp.float32),
        grid_spec=pltpu.PrefetchScalarGridSpec(
            num_scalar_prefetch=0,
            grid=(num_chunks, steps_per_chunk),
            in_specs=[
                pl.BlockSpec((tm, C), row_map),           # preds row tile (native dtype)
                pl.BlockSpec((tm, 1), row_map),           # target logits
                pl.BlockSpec((tm, 1), row_map),           # per-row class weights
            ],
            out_specs=pl.BlockSpec((1, 8, 128), lambda c, j: (c, 0, 0)),
        ),
        compiler_params=pltpu.CompilerParams(
            dimension_semantics=("parallel", "arbitrary"),
            vmem_limit_bytes=vmem_limit,
        ),
    )(preds2d, logit_t, w_t)

    # every element of a chunk's (8,128) block holds the same accumulated sum
    return jnp.sum(partials[:, 0, 0]) / jnp.float32(N)


def _reference_loss(preds, targs, class_weight, gamma):
    C = preds.shape[-1]
    p2 = preds.reshape(-1, C).astype(jnp.float32)
    t1 = targs.reshape(-1)
    logp = jax.nn.log_softmax(p2, axis=-1)
    logp_t = jnp.take_along_axis(logp, t1[:, None], axis=-1)[:, 0]
    p_t = jnp.exp(logp_t)
    w = (jnp.ones((C,), jnp.float32) if class_weight is None
         else class_weight.astype(jnp.float32))
    ce = -w[t1] * logp_t
    focal = jnp.power(1.0 - p_t, gamma)
    return jnp.mean(focal * ce)


if __name__ == "__main__":
    key = jax.random.PRNGKey(0)

    # Test 1: (batch=2, seq=8, classes=8), weighted classes, gamma=2.0
    B, S, C = 2, 8, 8
    gamma = 2.0
    k1, k2, k3, k4 = jax.random.split(key, 4)
    preds = jax.random.normal(k1, (B, S, C), dtype=jnp.float32)
    targs = jax.random.randint(k2, (B, S), 0, C, dtype=jnp.int32)
    class_weight = jnp.linspace(0.5, 1.5, C, dtype=jnp.float32)

    loss = focal_ce_loss(preds, targs, class_weight, gamma)
    loss = jax.block_until_ready(loss)
    ref = _reference_loss(preds, targs, class_weight, gamma)
    assert jnp.allclose(loss, ref, rtol=1e-5, atol=1e-5), (loss, ref)

    # Test 2: ragged N (padding path), no class weights, non-integer gamma
    N2, C2 = 12, 10
    preds2 = jax.random.normal(k3, (N2, C2), dtype=jnp.float32)
    targs2 = jax.random.randint(k4, (N2,), 0, C2, dtype=jnp.int32)
    loss2 = focal_ce_loss(preds2, targs2, None, 1.5)
    loss2 = jax.block_until_ready(loss2)
    ref2 = _reference_loss(preds2, targs2, None, 1.5)
    assert jnp.allclose(loss2, ref2, rtol=1e-5, atol=1e-5), (loss2, ref2)

    print("KERNEL_OK")
</pallas_src>

<mosaic_0001>
module attributes {stable_mosaic.version = 11 : i64} {
  func.func @_focal_ce_kernel(%arg0: i32, %arg1: i32, %arg2: memref<8x8xf32, #tpu.memory_space<vmem>>, %arg3: memref<8x1xf32, #tpu.memory_space<vmem>>, %arg4: memref<8x1xf32, #tpu.memory_space<vmem>>, %arg5: memref<1x8x128xf32, #tpu.memory_space<vmem>>) attributes {dimension_semantics = [#tpu.dimension_semantics<parallel>, #tpu.dimension_semantics<arbitrary>], iteration_bounds = array<i64: 2, 1>, scalar_prefetch = 0 : i64, scratch_operands = 0 : i64, tpu.core_type = #tpu.core_type<tc>, window_params = [{transform_indices = @transform_0, window_bounds = array<i64: 8, 8>}, {transform_indices = @transform_1, window_bounds = array<i64: 8, 1>}, {transform_indices = @transform_2, window_bounds = array<i64: 8, 1>}, {transform_indices = @transform_3, window_bounds = array<i64: 1, 8, 128>}]} {
    %c0_i32 = arith.constant 0 : i32
    %0 = arith.cmpi eq, %arg1, %c0_i32 : i32
    %1 = arith.extui %0 : i1 to i32
    %c0_i32_0 = arith.constant 0 : i32
    %2 = arith.cmpi ne, %1, %c0_i32_0 : i32
    scf.if %2 {
      %cst_17 = arith.constant 0.000000e+00 : f32
      %34 = vector.broadcast %cst_17 : f32 to vector<1x8x128xf32>
      %c0_18 = arith.constant 0 : index
      %c0_19 = arith.constant 0 : index
      %c0_20 = arith.constant 0 : index
      %35 = vector.load %arg5[%c0_18, %c0_19, %c0_20] : memref<1x8x128xf32, #tpu.memory_space<vmem>>, vector<1x8x128xf32>
      tpu.vector_store %arg5[%c0_18, %c0_19, %c0_20], %34 {strides = array<i32>} : memref<1x8x128xf32, #tpu.memory_space<vmem>>, vector<1x8x128xf32>,
    } else {
    }
    %c0 = arith.constant 0 : index
    %c0_1 = arith.constant 0 : index
    %3 = vector.load %arg2[%c0, %c0_1] : memref<8x8xf32, #tpu.memory_space<vmem>>, vector<8x8xf32>
    %c0_2 = arith.constant 0 : index
    %c0_3 = arith.constant 0 : index
    %4 = vector.load %arg3[%c0_2, %c0_3] : memref<8x1xf32, #tpu.memory_space<vmem>>, vector<8x1xf32>
    %c0_4 = arith.constant 0 : index
    %c0_5 = arith.constant 0 : index
    %5 = vector.load %arg4[%c0_4, %c0_5] : memref<8x1xf32, #tpu.memory_space<vmem>>, vector<8x1xf32>
    %cst = arith.constant dense<0xFF800000> : vector<8xf32>
    %6 = vector.multi_reduction <maximumf>, %3, %cst [1] : vector<8x8xf32> to vector<8xf32>
    %7 = vector.shape_cast %6 : vector<8xf32> to vector<8x1xf32>
    %8 = vector.broadcast %7 : vector<8x1xf32> to vector<8x8xf32>
    %9 = arith.subf %3, %8 : vector<8x8xf32>
    %10 = math.exp %9 : vector<8x8xf32>
    %cst_6 = arith.constant dense<0.000000e+00> : vector<8xf32>
    %11 = vector.multi_reduction <add>, %10, %cst_6 [1] : vector<8x8xf32> to vector<8xf32>
    %12 = vector.shape_cast %11 : vector<8xf32> to vector<8x1xf32>
    %13 = math.log %12 : vector<8x1xf32>
    %14 = arith.subf %4, %7 : vector<8x1xf32>
    %15 = arith.subf %14, %13 : vector<8x1xf32>
    %16 = math.exp %15 : vector<8x1xf32>
    %cst_7 = arith.constant 1.000000e+00 : f32
    %17 = vector.broadcast %cst_7 : f32 to vector<8x1xf32>
    %18 = arith.subf %17, %16 : vector<8x1xf32>
    %cst_8 = arith.constant 0.000000e+00 : f32
    %19 = vector.broadcast %cst_8 : f32 to vector<8x1xf32>
    %20 = arith.maximumf %18, %19 : vector<8x1xf32>
    %21 = arith.mulf %20, %20 : vector<8x1xf32>
    %cst_9 = arith.constant 0.000000e+00 : f32
    %22 = vector.broadcast %cst_9 : f32 to vector<8x1xf32>
    %23 = arith.subf %22, %5 : vector<8x1xf32>
    %24 = arith.mulf %23, %15 : vector<8x1xf32>
    %c0_10 = arith.constant 0 : index
    %c0_11 = arith.constant 0 : index
    %c0_12 = arith.constant 0 : index
    %25 = vector.load %arg5[%c0_10, %c0_11, %c0_12] : memref<1x8x128xf32, #tpu.memory_space<vmem>>, vector<1x8x128xf32>
    %26 = arith.mulf %21, %24 : vector<8x1xf32>
    %27 = vector.shape_cast %26 : vector<8x1xf32> to vector<1x8x1xf32>
    %cst_13 = arith.constant dense<0.000000e+00> : vector<1xf32>
    %28 = vector.multi_reduction <add>, %27, %cst_13 [1, 2] : vector<1x8x1xf32> to vector<1xf32>
    %29 = vector.shape_cast %28 : vector<1xf32> to vector<1x1x1xf32>
    %30 = vector.extract %29[0, 0, 0] : f32 from vector<1x1x1xf32>
    %31 = vector.broadcast %30 : f32 to vector<1x8x128xf32>
    %32 = arith.addf %25, %31 : vector<1x8x128xf32>
    %c0_14 = arith.constant 0 : index
    %c0_15 = arith.constant 0 : index
    %c0_16 = arith.constant 0 : index
    %33 = vector.load %arg5[%c0_14, %c0_15, %c0_16] : memref<1x8x128xf32, #tpu.memory_space<vmem>>, vector<1x8x128xf32>
    tpu.vector_store %arg5[%c0_14, %c0_15, %c0_16], %32 {strides = array<i32>} : memref<1x8x128xf32, #tpu.memory_space<vmem>>, vector<1x8x128xf32>,
    return
  }
  func.func @transform_0(%arg0: i32, %arg1: i32) -> (i32, i32) {
    %c1_i32 = arith.constant 1 : i32
    %0 = arith.muli %arg0, %c1_i32 : i32
    %1 = arith.addi %0, %arg1 : i32
    %c0_i32 = arith.constant 0 : i32
    %c0_i32_0 = arith.constant 0 : i32
    return %1, %c0_i32 : i32, i32
  }
  func.func @transform_1(%arg0: i32, %arg1: i32) -> (i32, i32) {
    %c1_i32 = arith.constant 1 : i32
    %0 = arith.muli %arg0, %c1_i32 : i32
    %1 = arith.addi %0, %arg1 : i32
    %c0_i32 = arith.constant 0 : i32
    %c0_i32_0 = arith.constant 0 : i32
    return %1, %c0_i32 : i32, i32
  }
  func.func @transform_2(%arg0: i32, %arg1: i32) -> (i32, i32) {
    %c1_i32 = arith.constant 1 : i32
    %0 = arith.muli %arg0, %c1_i32 : i32
    %1 = arith.addi %0, %arg1 : i32
    %c0_i32 = arith.constant 0 : i32
    %c0_i32_0 = arith.constant 0 : i32
    return %1, %c0_i32 : i32, i32
  }
  func.func @transform_3(%arg0: i32, %arg1: i32) -> (i32, i32, i32) {
    %c0_i32 = arith.constant 0 : i32
    %c0_i32_0 = arith.constant 0 : i32
    %c0_i32_1 = arith.constant 0 : i32
    return %arg0, %c0_i32, %c0_i32_0 : i32, i32, i32
  }
}

</mosaic_0001>

<llo_original>
// kernel: tpu_custom_call.1
$region0: #{tpu_custom_call.1}
  #allocation0 [shape = 'u32[]', space=smem, size = 0x4, offset = 0x4, fixed_abs, tag = 'smem constant byte address 0x4 - core index']
  #allocation1 [shape = 'u32[72,128]{1,0:T(1,128)}', space=vmem, size = 0x9000, scoped, tag = 'internal scratch']
  %s0 = inlined_call_operand.vmem [shape: f32[16,8], index: 0, kind: input, shape index: {}]
  %s1 = inlined_call_operand.vmem [shape: f32[16,1], index: 1, kind: input, shape index: {}]
  %s2 = inlined_call_operand.vmem [shape: f32[16,1], index: 2, kind: input, shape index: {}]
  %s3 = inlined_call_operand.hbm [shape: f32[2,8,128], index: 3, kind: output, shape index: {}]
  %s4 = sld [smem:[#allocation0]]
  $region49: #{tpu_custom_call.1} parent=0
    _
  %s6 = ssub.s32 1, %s4
  %s7 = scalar_select 0, %s6, %s4
  $region1: #{tpu_custom_call.1} parent=0
    #allocation2 [shape = 'u8[8192]{0}', space=vmem, size = 0x2000, scoped, tag = 'output window, operand 0']
    #allocation3 [shape = 's32[2]{0}', space=sflag, size = 0x8, scoped, tag = 'scoped memory for tpu_custom_call.1']
    %8 = vsyncpa [#allocation3], 0
    %s9 = scalar_lea.sflag [#allocation3], 1
    %10 = vsyncpa %s9, 0
    loop: start=0, step=1, limit=4
    $region2: #{tpu_custom_call.1} parent=1 // loop_pre_header
      _
    $region3: #{tpu_custom_call.1} parent=1 // loop_header
      %s12 = sphi 0, %s16
      %p13 = scmp.ge.s32.totalorder %s12, 4
      %s19 = sphi 0, %s31
      %s20 = sphi 0, %s27
      %s21 = sphi 0, %s19
      %s22 = sphi 0, %s20
      %s23 = sphi 0, %s21
      %s24 = sphi 0, %s22
      %s36 = sphi 0, %s38
      %s39 = sphi 0, %s36
      %s40 = sphi 0, %s39
      %s56 = sphi 0, %s40
      %s64 = sphi 0, %s66
      %s67 = sphi 0, %s64
      %s68 = sphi 0, %s67
      %s84 = sphi 0, %s68
      %s92 = sphi 0, %s94
      %s95 = sphi 0, %s92
      %s96 = sphi 0, %s95
      %s112 = sphi 0, %s96
      %s118 = sphi 0, %s120
      %s121 = sphi 0, %s118
      %s122 = sphi 0, %s121
      %s138 = sphi 0, %s122
    $region4: #{tpu_custom_call.1} parent=1 // loop_header_branch
      %15 = sbr.rel (%p13) target = $region8
    $region5: #{tpu_custom_call.1} parent=1 // loop_body
      %s17 = ssub.s32 %s12, 1
      %s18 = ssub.s32 %s12, 2
      %s25 = sadd.s32 1, %s20
      %p26 = scmp.ge.s32.totalorder %s25, 1
      %s27 = scalar_select %p26, 0, %s25
      %s28 = sadd.s32 1, %s19
      %s29 = scalar_select %p26, %s28, %s19
      %p30 = scmp.ge.s32.totalorder %s29, 2
      %s31 = scalar_select %p30, 0, %s29
      %s32 = sadd.s32 %s19, %s20
      %s33 = sadd.s32 %s31, %s27
      %s34 = ssub.s32 %s32, %s33
      %p35 = scmp.eq.s32.totalorder %s34, 0
      %s37 = sadd.s32 %s36, 1
      %s38 = scalar_select %p35, %s36, %s37
      %p41 = pneg %p35
      %p42 = scmp.eq.s32.totalorder %s12, 1
      %p43 = por %p41, %p42
      %p44 = scmp.ne.s32.totalorder %s36, %s39
      %p45 = scmp.eq.s32.totalorder %s12, 0
      %p46 = por %p44, %p45
      %p47 = scmp.ne.s32.totalorder %s36, %s39
      %p48 = scmp.eq.s32.totalorder %s17, 1
      %p49 = por %p47, %p48
      %p50 = scmp.ne.s32.totalorder %s39, %s40
      %p51 = scmp.eq.s32.totalorder %s17, 0
      %p52 = por %p50, %p51
      %p53 = scmp.ne.s32.totalorder %s39, %s40
      %p54 = scmp.eq.s32.totalorder %s18, 1
      %p55 = por %p53, %p54
      %p57 = scmp.ne.s32.totalorder %s40, %s56
      %p58 = scmp.eq.s32.totalorder %s18, 0
      %p59 = por %p57, %p58
      %s60 = sadd.s32 %s19, %s20
      %s61 = sadd.s32 %s31, %s27
      %s62 = ssub.s32 %s60, %s61
      %p63 = scmp.eq.s32.totalorder %s62, 0
      %s65 = sadd.s32 %s64, 1
      %s66 = scalar_select %p63, %s64, %s65
      %p69 = pneg %p63
      %p70 = scmp.eq.s32.totalorder %s12, 1
      %p71 = por %p69, %p70
      %p72 = scmp.ne.s32.totalorder %s64, %s67
      %p73 = scmp.eq.s32.totalorder %s12, 0
      %p74 = por %p72, %p73
      %p75 = scmp.ne.s32.totalorder %s64, %s67
      %p76 = scmp.eq.s32.totalorder %s17, 1
      %p77 = por %p75, %p76
      %p78 = scmp.ne.s32.totalorder %s67, %s68
      %p79 = scmp.eq.s32.totalorder %s17, 0
      %p80 = por %p78, %p79
      %p81 = scmp.ne.s32.totalorder %s67, %s68
      %p82 = scmp.eq.s32.totalorder %s18, 1
      %p83 = por %p81, %p82
      %p85 = scmp.ne.s32.totalorder %s68, %s84
      %p86 = scmp.eq.s32.totalorder %s18, 0
      %p87 = por %p85, %p86
      %s88 = sadd.s32 %s19, %s20
      %s89 = sadd.s32 %s31, %s27
      %s90 = ssub.s32 %s88, %s89
      %p91 = scmp.eq.s32.totalorder %s90, 0
      %s93 = sadd.s32 %s92, 1
      %s94 = scalar_select %p91, %s92, %s93
      %p97 = pneg %p91
      %p98 = scmp.eq.s32.totalorder %s12, 1
      %p99 = por %p97, %p98
      %p100 = scmp.ne.s32.totalorder %s92, %s95
      %p101 = scmp.eq.s32.totalorder %s12, 0
      %p102 = por %p100, %p101
      %p103 = scmp.ne.s32.totalorder %s92, %s95
      %p104 = scmp.eq.s32.totalorder %s17, 1
      %p105 = por %p103, %p104
      %p106 = scmp.ne.s32.totalorder %s95, %s96
      %p107 = scmp.eq.s32.totalorder %s17, 0
      %p108 = por %p106, %p107
      %p109 = scmp.ne.s32.totalorder %s95, %s96
      %p110 = scmp.eq.s32.totalorder %s18, 1
      %p111 = por %p109, %p110
      %p113 = scmp.ne.s32.totalorder %s96, %s112
      %p114 = scmp.eq.s32.totalorder %s18, 0
      %p115 = por %p113, %p114
      %s116 = ssub.s32 %s19, %s31
      %p117 = scmp.eq.s32.totalorder %s116, 0
      %s119 = sadd.s32 %s118, 1
      %s120 = scalar_select %p117, %s118, %s119
      %p123 = pneg %p117
      %p124 = scmp.eq.s32.totalorder %s12, 1
      %p125 = por %p123, %p124
      %p126 = scmp.ne.s32.totalorder %s118, %s121
      %p127 = scmp.eq.s32.totalorder %s12, 0
      %p128 = por %p126, %p127
      %p129 = scmp.ne.s32.totalorder %s118, %s121
      %p130 = scmp.eq.s32.totalorder %s17, 1
      %p131 = por %p129, %p130
      %p132 = scmp.ne.s32.totalorder %s121, %s122
      %p133 = scmp.eq.s32.totalorder %s17, 0
      %p134 = por %p132, %p133
      %p135 = scmp.ne.s32.totalorder %s121, %s122
      %p136 = scmp.eq.s32.totalorder %s18, 1
      %p137 = por %p135, %p136
      %p139 = scmp.ne.s32.totalorder %s122, %s138
      %p140 = scmp.eq.s32.totalorder %s18, 0
      %p141 = por %p139, %p140
      %p142 = scmp.le.s32.totalorder 1, %s12
      %p143 = scmp.lt.s32.totalorder %s12, 3
      %p144 = pnand %p142, %p143
      %p145 = pneg %p144
      // Predicated region
      $region9: #{tpu_custom_call.1} parent=5 // pred_check
        _
      $region10: #{tpu_custom_call.1} parent=5 // pred_check_branch
        %147 = sbr.rel (%p144) target = $region12
      $region11: #{tpu_custom_call.1} parent=5 // pred_region
        %s148 = ssub.s32 %s12, 1
      $region12: #{tpu_custom_call.1} parent=5 // pred_fallthru
        _
      %p149 = scmp.lt.s32.totalorder %s12, 2
      // Predicated region
      $region13: #{tpu_custom_call.1} parent=5 // pred_check
        %p150 = pneg %p149
      $region14: #{tpu_custom_call.1} parent=5 // pred_check_branch
        %152 = sbr.rel (%p150) target = $region16
      $region15: #{tpu_custom_call.1} parent=5 // pred_region
        // Predicated region
        $region17: #{tpu_custom_call.1} parent=15 // pred_check
          %p153 = pneg %p46
        $region18: #{tpu_custom_call.1} parent=15 // pred_check_branch
          %155 = sbr.rel (%p153) target = $region20
        $region19: #{tpu_custom_call.1} parent=15 // pred_region
          %s156 = sadd.s32 %s19, %s20
          %p157 = scmp.lt.s32.totalorder %s156, 1
          %s158 = scalar_select %p157, %s156, 1
          %s159 = smul.addr %s158, 8
          %s160 = scalar_lea.vmem %s0, %s159
          %s161 = sadd.s32 %s19, %s20
        $region20: #{tpu_custom_call.1} parent=15 // pred_fallthru
          _
        // Predicated region
        $region21: #{tpu_custom_call.1} parent=15 // pred_check
          %p162 = pneg %p74
        $region22: #{tpu_custom_call.1} parent=15 // pred_check_branch
          %164 = sbr.rel (%p162) target = $region24
        $region23: #{tpu_custom_call.1} parent=15 // pred_region
          %s165 = sadd.s32 %s19, %s20
          %p166 = scmp.lt.s32.totalorder %s165, 1
          %s167 = scalar_select %p166, %s165, 1
          %s168 = smul.addr %s167, 8
          %s169 = scalar_lea.vmem %s1, %s168
          %s170 = sadd.s32 %s19, %s20
        $region24: #{tpu_custom_call.1} parent=15 // pred_fallthru
          _
        // Predicated region
        $region25: #{tpu_custom_call.1} parent=15 // pred_check
          %p171 = pneg %p102
        $region26: #{tpu_custom_call.1} parent=15 // pred_check_branch
          %173 = sbr.rel (%p171) target = $region28
        $region27: #{tpu_custom_call.1} parent=15 // pred_region
          %s174 = sadd.s32 %s19, %s20
          %p175 = scmp.lt.s32.totalorder %s174, 1
          %s176 = scalar_select %p175, %s174, 1
          %s177 = smul.addr %s176, 8
          %s178 = scalar_lea.vmem %s2, %s177
          %s179 = sadd.s32 %s19, %s20
        $region28: #{tpu_custom_call.1} parent=15 // pred_fallthru
          _
      $region16: #{tpu_custom_call.1} parent=5 // pred_fallthru
        _
      %p180 = scmp.le.s32.totalorder 1, %s12
      %p181 = scmp.lt.s32.totalorder %s12, 3
      %p182 = pnand %p180, %p181
      %p183 = pneg %p182
      // Predicated region
      $region29: #{tpu_custom_call.1} parent=5 // pred_check
        _
      $region30: #{tpu_custom_call.1} parent=5 // pred_check_branch
        %185 = sbr.rel (%p182) target = $region32
      $region31: #{tpu_custom_call.1} parent=5 // pred_region
        %s186 = ssub.s32 %s12, 1
        %s187 = sadd.s32 %s21, %s22
        %p188 = scmp.lt.s32.totalorder %s187, 1
        %s189 = scalar_select %p188, %s187, 1
        %s190 = smul.addr %s189, 8
        %s191 = scalar_lea.vmem %s0, %s190
        %p192 = pneg %p52
        %p193 = pneg %p49
        %s194 = sadd.s32 %s21, %s22
        %p195 = scmp.lt.s32.totalorder %s194, 1
        %s196 = scalar_select %p195, %s194, 1
        %s197 = smul.addr %s196, 8
        %s198 = scalar_lea.vmem %s1, %s197
        %p199 = pneg %p80
        %p200 = pneg %p77
        %s201 = sadd.s32 %s21, %s22
        %p202 = scmp.lt.s32.totalorder %s201, 1
        %s203 = scalar_select %p202, %s201, 1
        %s204 = smul.addr %s203, 8
        %s205 = scalar_lea.vmem %s2, %s204
        %p206 = pneg %p108
        %p207 = pneg %p105
        %p208 = pneg %p134
        %p209 = pneg %p131
        %s210 = sand.u32 %s121, 1
        %s211 = scalar_lea.sflag [#allocation3], %s210
        %s212 = sand.u32 %s121, 1
        %s213 = smul.addr %s212, 8
        %s214 = scalar_lea.vmem [#allocation2], %s213
        %s215 = sadd.s32 %s21, %s22
        %p216 = scmp.lt.s32.totalorder %s215, 1
        %s217 = scalar_select %p216, %s215, 1
        %s218 = smul.addr %s217, 8
        %s219 = scalar_lea.vmem %s0, %s218
        %s220 = sadd.s32 %s21, %s22
        %s221 = sadd.s32 %s21, %s22
        %p222 = scmp.lt.s32.totalorder %s221, 1
        %s223 = scalar_select %p222, %s221, 1
        %s224 = smul.addr %s223, 8
        %s225 = scalar_lea.vmem %s1, %s224
        %s226 = sadd.s32 %s21, %s22
        %s227 = sadd.s32 %s21, %s22
        %p228 = scmp.lt.s32.totalorder %s227, 1
        %s229 = scalar_select %p228, %s227, 1
        %s230 = smul.addr %s229, 8
        %s231 = scalar_lea.vmem %s2, %s230
        %s232 = sadd.s32 %s21, %s22
        %p233 = scmp.eq.s32.totalorder %s22, 0
        // Predicated region
        $region33: #{tpu_custom_call.1} parent=31 // pred_check
          %p234 = pneg %p233
        $region34: #{tpu_custom_call.1} parent=31 // pred_check_branch
          %236 = sbr.rel (%p234) target = $region36
        $region35: #{tpu_custom_call.1} parent=31 // pred_region
          %237 = vst [vmem:[%s214] sm:$0xff] 0.0
        $region36: #{tpu_custom_call.1} parent=31 // pred_fallthru
          _
        %v238 = vld [vmem:[%s219] sm:$0xff]
        %v239 = vld [vmem:[%s225] sm:$0xff]
        %v240 = vld [vmem:[%s231] sm:$0xff]
        %vm241 = vcmask 64512
        %v242 = vsel %vm241, %v238, -inf
        %243 = vmax.xlane.f32.xlu0 %v242
        %v244 = vpop.xlane.xlu0 %243
        %v245 = vsub.f32 %v238, %v244
        %v246 = vmul.f32 %v245, 1.442695
        %v247 = vpow.pop %v246
        %v248 = vsel %vm241, %v247, 0.0
        %249 = vadd.xlane.f32.xlu0 %v248
        %v250 = vpop.xlane.xlu0 %249
        %v251 = vlog2.pop %v250
        %v252 = vmul.f32 %v251, 0.6931472
        %v253 = vsub.f32 %v239, %v244
        %v254 = vsub.f32 %v253, %v252
        %v255 = vmul.f32 %v254, 1.442695
        %v256 = vpow.pop %v255
        %v257 = vsub.f32 1.0, %v256
        %v258 = vmax.f32 %v257, 0.0
        %v259 = vmul.f32 %v258, %v258
        %v260 = vsub.f32 0.0, %v240
        %v261 = vmul.f32 %v260, %v254
        %v262 = vld [vmem:[%s214] sm:$0xff]
        %v263 = vmul.f32 %v259, %v261
        %vm264 = vcmask 7168
        %v265 = vsel %vm264, %v263, 0.0
        %266 = vadd.xlane.f32.xlu0 %v265
        %v267 = vpop.xlane.xlu0 %266
        %v268 = vrot.slane %v267, 4
        %v269 = vadd.f32 %v267, %v268
        %v270 = vrot.slane %v269, 2
        %v271 = vadd.f32 %v269, %v270
        %v272 = vrot.slane %v271, 1
        %v273 = vadd.f32 %v271, %v272
        %s274 = vtos %v273
        %v275 = vstv %s274
        %v276 = vadd.f32 %v262, %v275
        %277 = vst [vmem:[%s214] sm:$0xff] %v276
        %s278 = sand.u32 %s121, 1
        %s279 = scalar_lea.sflag [#allocation3], %s278
        %s280 = sand.u32 %s121, 1
        %s281 = smul.addr %s280, 8
        %s282 = scalar_lea.vmem [#allocation2], %s281
        // Predicated region
        $region37: #{tpu_custom_call.1} parent=31 // pred_check
          %p283 = pneg %p131
        $region38: #{tpu_custom_call.1} parent=31 // pred_check_branch
          %285 = sbr.rel (%p283) target = $region40
        $region39: #{tpu_custom_call.1} parent=31 // pred_region
          %287 = vsyncadd %s279, 0
          %s288 = smul.addr %s21, 8
          %s289 = scalar_lea.hbm %s3, %s288
          %s291 = sshll.u32 %s282, 4
          %s292 = int_to_ptr.vmem [resolvable:$true] %s291
          %s293 = sshll.u32 %s289, 4
          %s294 = int_to_ptr.hbm [resolvable:$true] %s293
          %296 = dma.vmem_to_hbm [thread:$0]  %s292, 128, %s294, %s279
        $region40: #{tpu_custom_call.1} parent=31 // pred_fallthru
          _
      $region32: #{tpu_custom_call.1} parent=5 // pred_fallthru
        _
      %p297 = scmp.le.s32.totalorder 2, %s12
      // Predicated region
      $region41: #{tpu_custom_call.1} parent=5 // pred_check
        %p298 = pneg %p297
      $region42: #{tpu_custom_call.1} parent=5 // pred_check_branch
        %300 = sbr.rel (%p298) target = $region44
      $region43: #{tpu_custom_call.1} parent=5 // pred_region
        %s301 = ssub.s32 %s12, 2
        // Predicated region
        $region45: #{tpu_custom_call.1} parent=43 // pred_check
          %p302 = pneg %p137
        $region46: #{tpu_custom_call.1} parent=43 // pred_check_branch
          %304 = sbr.rel (%p302) target = $region48
        $region47: #{tpu_custom_call.1} parent=43 // pred_region
          %s305 = sand.u32 %s122, 1
          %s306 = scalar_lea.sflag [#allocation3], %s305
          %s307 = sand.u32 %s122, 1
          %s308 = smul.addr %s307, 8
          %s309 = scalar_lea.vmem [#allocation2], %s308
          %311 = dma.done %s306, 128
        $region48: #{tpu_custom_call.1} parent=43 // pred_fallthru
          _
      $region44: #{tpu_custom_call.1} parent=5 // pred_fallthru
        _
    $region6: #{tpu_custom_call.1} parent=1 // loop_footer
      %s16 = sadd.s32 1, %s12
    $region7: #{tpu_custom_call.1} parent=1 // loop_footer_branch
      %11 = sbr.rel target = $region3
    $region8: #{tpu_custom_call.1} parent=1 // loop_exit
      _
    %312 = vsyncpa [#allocation3], 1
    %s313 = scalar_lea.sflag [#allocation3], 1
    %314 = vsyncpa %s313, 1

</llo_original>
